<compile_context>
chip_gen: v6e
topology: v6e:2x2x1
jax: 0.10.0
libtpu: 0.0.40
codegen_flags: <defaults>
</compile_context>

<pallas_src>
import jax
import jax.numpy as jnp
from jax.experimental import pallas as pl
from jax.experimental.pallas import tpu as pltpu


def _round_up(x, m):
    return ((x + m - 1) // m) * m


def _vmem_budget_bytes():
    """Generation-aware scoped-VMEM budget (~0.75x physical; 48 MiB fallback)."""
    try:
        cap = pltpu.get_tpu_info().vmem_capacity_bytes
    except Exception:
        cap = 64 * 1024 * 1024  # conservative: v7x physical VMEM per TC
    return int(cap) * 3 // 4


def _pick_tile_rows(rows_total, n_batch, *, bytes_budget, row_bytes, align,
                    target_rows=2048):
    """Largest divisor of rows_total (multiple of `align`) that fits the VMEM
    budget / target; keeps >= 2 grid steps when n_batch == 1 (v7x megacore)."""
    cap = max(min(target_rows, bytes_budget // max(row_bytes, 1)), align)
    cands = [d for d in range(align, rows_total + 1, align)
             if rows_total % d == 0 and d <= cap]
    if not cands:
        return rows_total  # tiny case: full-extent block is always legal
    best = cands[-1]
    if n_batch == 1 and best == rows_total and len(cands) > 1:
        best = cands[-2]   # split so the grid has >= 2 steps
    return best


def _gemm_bias_relu_kernel(p_ref, w_ref, b_ref, o_ref):
    """One (batch, row-tile) grid step: lane-dense GEMM + bias + ReLU.

    p_ref: (1, tile_rows, K_pad)     im2col patches (K zero-padded to 128).
    w_ref: (K_pad, Cout_pad)         im2col weight matrix, lane-dense.
    b_ref: (1, Cout_pad)             f32 bias.
    o_ref: (1, tile_rows, Cout_pad)  lane-dense output slab.
    """
    acc = jnp.dot(p_ref[0], w_ref[...], preferred_element_type=jnp.float32)
    acc = acc + b_ref[...]                     # bias (f32 epilogue)
    o_ref[0] = jnp.maximum(acc, 0.0).astype(o_ref.dtype)   # ReLU + cast


def conv2d_block(x_nchw, weight_oihw, bias, *, ks, st, padding,
                 compute_dtype=jnp.bfloat16):
    """Forward of Conv2dBlock(in,out,ks,st,padding) with defaults
    (zero pad, no norm, ReLU, bias, activation_first=False).

    compute_dtype: dtype of the MXU operands (default bf16 — MXU-native on
    v5e/v6e/v7x); accumulation and the bias/ReLU epilogue are always f32.
    Pass jnp.float32 for an exact f32 path.
    """
    N, Cin, H, W = x_nchw.shape
    Cout = weight_oihw.shape[0]
    out_dtype = x_nchw.dtype
    cdt = jnp.dtype(compute_dtype if compute_dtype is not None else out_dtype)

    # ---- XLA glue: layout, zero pad, im2col, parameter packing ----
    # TODO(synk): if the surrounding model runs NHWC end-to-end, drop the
    # NCHW<->NHWC transposes and the post-kernel slice (each is an HBM pass).
    x_nhwc = jnp.transpose(x_nchw, (0, 2, 3, 1))
    x_pad = jnp.pad(x_nhwc,
                    ((0, 0), (padding, padding), (padding, padding), (0, 0)))
    Hp, Wp = H + 2 * padding, W + 2 * padding
    Ho = (Hp - ks) // st + 1
    Wo = (Wp - ks) // st + 1

    K = ks * ks * Cin
    K_pad = _round_up(K, 128)
    Cout_pad = _round_up(Cout, 128)
    # TODO(synk): for ks*ks*Cin >> 128, move im2col back into the kernel with
    # strided ref reads / per-tap GEMM accumulation to avoid the ks*ks HBM
    # expansion of wrapper-side patch extraction.

    # im2col with (kh, kw, cin) column ordering — matches the weight repack.
    taps = []
    for kh in range(ks):
        for kw in range(ks):
            taps.append(x_pad[:, kh:kh + (Ho - 1) * st + 1:st,
                              kw:kw + (Wo - 1) * st + 1:st, :])
    patches = jnp.concatenate(taps, axis=-1).reshape(N, Ho * Wo, K)
    patches = jnp.pad(patches, ((0, 0), (0, 0), (0, K_pad - K))).astype(cdt)

    # OIHW -> (kh, kw, Cin, Cout) -> (K, Cout) -> zero-pad to (K_pad, Cout_pad).
    w2d = jnp.transpose(weight_oihw, (2, 3, 1, 0)).reshape(K, Cout)
    w2d = jnp.pad(w2d, ((0, K_pad - K), (0, Cout_pad - Cout))).astype(cdt)
    b2 = jnp.pad(bias, (0, Cout_pad - Cout)).reshape(1, Cout_pad)
    b2 = b2.astype(jnp.float32)

    # ---- tiling ----
    rows_total = Ho * Wo
    align = 16 if (cdt.itemsize < 4 or jnp.dtype(out_dtype).itemsize < 4) else 8
    vmem_budget = _vmem_budget_bytes()
    fixed_bytes = K_pad * Cout_pad * cdt.itemsize + Cout_pad * 4  # weight + bias
    row_bytes = (2 * K_pad * cdt.itemsize                         # patches x2 (pipeline)
                 + 2 * Cout_pad * jnp.dtype(out_dtype).itemsize   # output x2 (pipeline)
                 + Cout_pad * 4)                                  # f32 epilogue temp
    tile_rows = _pick_tile_rows(
        rows_total, N,
        bytes_budget=max(vmem_budget - fixed_bytes, row_bytes * align),
        row_bytes=row_bytes, align=align)
    n_tiles = rows_total // tile_rows

    out_flat = pl.pallas_call(
        _gemm_bias_relu_kernel,
        out_shape=jax.ShapeDtypeStruct((N, rows_total, Cout_pad), out_dtype),
        grid_spec=pltpu.PrefetchScalarGridSpec(
            num_scalar_prefetch=0,
            grid=(N, n_tiles),
            in_specs=[
                # Lane-dense im2col patch slab for this (batch, row-tile).
                pl.BlockSpec((1, tile_rows, K_pad), lambda n, t: (n, t, 0)),
                # Weight / bias constant over the grid -> DMA'd once.
                pl.BlockSpec((K_pad, Cout_pad), lambda n, t: (0, 0)),
                pl.BlockSpec((1, Cout_pad), lambda n, t: (0, 0)),
            ],
            out_specs=pl.BlockSpec((1, tile_rows, Cout_pad),
                                   lambda n, t: (n, t, 0)),
        ),
        compiler_params=pltpu.CompilerParams(
            dimension_semantics=("parallel", "parallel"),
            vmem_limit_bytes=vmem_budget),
    )(patches, w2d, b2)

    # ---- XLA glue: drop padded channels, back to NCHW ----
    # TODO(synk): when Cout << 128 and the output is large/mem-bound, benchmark
    # a masked Cout-wide store against this write amplification.
    out = out_flat[:, :, :Cout].reshape(N, Ho, Wo, Cout)
    return jnp.transpose(out, (0, 3, 1, 2))


def _reference(x_nchw, weight_oihw, bias, *, st, padding):
    y = jax.lax.conv_general_dilated(
        x_nchw, weight_oihw,
        window_strides=(st, st),
        padding=[(padding, padding), (padding, padding)],
        dimension_numbers=("NCHW", "OIHW", "NCHW"))
    y = y + bias.reshape(1, -1, 1, 1)
    return jnp.maximum(y, 0.0)


if __name__ == "__main__":
    # Conv2dBlock(in_dim=4, out_dim=8, ks=3, st=1, padding=1)
    N, Cin, H, W = 2, 4, 16, 16
    Cout, ks, st, padding = 8, 3, 1, 1

    key = jax.random.PRNGKey(0)
    kx, kw, kb = jax.random.split(key, 3)
    x = jax.random.normal(kx, (N, Cin, H, W), dtype=jnp.float32)
    # Deterministic parameter init (shapes follow nn.Conv2d(in_dim, out_dim, ks)).
    fan_in = Cin * ks * ks
    bound = 1.0 / (fan_in ** 0.5)
    weight = jax.random.uniform(kw, (Cout, Cin, ks, ks),
                                minval=-bound, maxval=bound, dtype=jnp.float32)
    bias = jax.random.uniform(kb, (Cout,), minval=-bound, maxval=bound,
                              dtype=jnp.float32)

    ref = _reference(x, weight, bias, st=st, padding=padding)

    # Exact f32 MXU-operand path: tight tolerance.
    out_f32 = conv2d_block(x, weight, bias, ks=ks, st=st, padding=padding,
                           compute_dtype=jnp.float32)
    out_f32 = jax.block_until_ready(out_f32)
    assert out_f32.shape == (N, Cout, H, W)
    assert jnp.allclose(out_f32, ref, atol=1e-4, rtol=1e-4), "f32 path mismatch"

    # Default bf16 MXU-operand path (f32 accumulation): looser tolerance.
    out_bf16 = conv2d_block(x, weight, bias, ks=ks, st=st, padding=padding)
    out_bf16 = jax.block_until_ready(out_bf16)
    assert out_bf16.shape == (N, Cout, H, W)
    assert jnp.allclose(out_bf16, ref, atol=3e-2, rtol=3e-2), "bf16 path mismatch"

    print("KERNEL_OK")
</pallas_src>

<mosaic_0001>
module attributes {stable_mosaic.version = 11 : i64} {
  func.func @_gemm_bias_relu_kernel(%arg0: i32, %arg1: i32, %arg2: memref<1x256x128xf32, #tpu.memory_space<vmem>>, %arg3: memref<128x128xf32, #tpu.memory_space<vmem>>, %arg4: memref<1x128xf32, #tpu.memory_space<vmem>>, %arg5: memref<1x256x128xf32, #tpu.memory_space<vmem>>) attributes {dimension_semantics = [#tpu.dimension_semantics<parallel>, #tpu.dimension_semantics<parallel>], iteration_bounds = array<i64: 2, 1>, scalar_prefetch = 0 : i64, scratch_operands = 0 : i64, tpu.core_type = #tpu.core_type<tc>, window_params = [{transform_indices = @transform_0, window_bounds = array<i64: 1, 256, 128>}, {pipeline_mode = #tpu.pipeline_mode<synchronous>, transform_indices = @transform_1, window_bounds = array<i64: 128, 128>}, {pipeline_mode = #tpu.pipeline_mode<synchronous>, transform_indices = @transform_2, window_bounds = array<i64: 1, 128>}, {transform_indices = @transform_3, window_bounds = array<i64: 1, 256, 128>}]} {
    %c0 = arith.constant 0 : index
    %c0_0 = arith.constant 0 : index
    %c0_1 = arith.constant 0 : index
    %0 = vector.load %arg2[%c0, %c0_0, %c0_1] : memref<1x256x128xf32, #tpu.memory_space<vmem>>, vector<1x256x128xf32>
    %1 = vector.shape_cast %0 : vector<1x256x128xf32> to vector<256x128xf32>
    %c0_2 = arith.constant 0 : index
    %c0_3 = arith.constant 0 : index
    %2 = vector.load %arg3[%c0_2, %c0_3] : memref<128x128xf32, #tpu.memory_space<vmem>>, vector<128x128xf32>
    %cst = arith.constant dense<0.000000e+00> : vector<256x128xf32>
    %3 = tpu.matmul %1, %2, %cst {dimension_numbers = #tpu.dot_dimension_numbers<[1], [0], [0], [1], [0, 0, 1, 1], [], []>} : vector<256x128xf32>, vector<128x128xf32>, vector<256x128xf32> -> vector<256x128xf32>
    %c0_4 = arith.constant 0 : index
    %c0_5 = arith.constant 0 : index
    %4 = vector.load %arg4[%c0_4, %c0_5] : memref<1x128xf32, #tpu.memory_space<vmem>>, vector<1x128xf32>
    %5 = vector.broadcast %4 : vector<1x128xf32> to vector<256x128xf32>
    %6 = arith.addf %3, %5 : vector<256x128xf32>
    %cst_6 = arith.constant 0.000000e+00 : f32
    %7 = vector.broadcast %cst_6 : f32 to vector<256x128xf32>
    %8 = arith.maximumf %6, %7 : vector<256x128xf32>
    %c0_7 = arith.constant 0 : index
    %c0_8 = arith.constant 0 : index
    %c0_9 = arith.constant 0 : index
    %9 = vector.load %arg5[%c0_7, %c0_8, %c0_9] : memref<1x256x128xf32, #tpu.memory_space<vmem>>, vector<1x256x128xf32>
    %10 = vector.shape_cast %9 : vector<1x256x128xf32> to vector<256x128xf32>
    %11 = vector.shape_cast %8 : vector<256x128xf32> to vector<1x256x128xf32>
    tpu.vector_store %arg5[%c0_7, %c0_8, %c0_9], %11 {strides = array<i32>} : memref<1x256x128xf32, #tpu.memory_space<vmem>>, vector<1x256x128xf32>,
    return
  }
  func.func @transform_0(%arg0: i32, %arg1: i32) -> (i32, i32, i32) {
    %c0_i32 = arith.constant 0 : i32
    %c0_i32_0 = arith.constant 0 : i32
    return %arg0, %arg1, %c0_i32 : i32, i32, i32
  }
  func.func @transform_1(%arg0: i32, %arg1: i32) -> (i32, i32) {
    %c0_i32 = arith.constant 0 : i32
    %c0_i32_0 = arith.constant 0 : i32
    %c0_i32_1 = arith.constant 0 : i32
    return %c0_i32, %c0_i32_0 : i32, i32
  }
  func.func @transform_2(%arg0: i32, %arg1: i32) -> (i32, i32) {
    %c0_i32 = arith.constant 0 : i32
    %c0_i32_0 = arith.constant 0 : i32
    %c0_i32_1 = arith.constant 0 : i32
    return %c0_i32, %c0_i32_0 : i32, i32
  }
  func.func @transform_3(%arg0: i32, %arg1: i32) -> (i32, i32, i32) {
    %c0_i32 = arith.constant 0 : i32
    %c0_i32_0 = arith.constant 0 : i32
    return %arg0, %arg1, %c0_i32 : i32, i32, i32
  }
}

</mosaic_0001>

<llo_original>
// kernel: tpu_custom_call.1
$region0: #{tpu_custom_call.1}
  #allocation0 [shape = 'u32[]', space=smem, size = 0x4, offset = 0x4, fixed_abs, tag = 'smem constant byte address 0x4 - core index']
  #allocation1 [shape = 'u32[144,128]{1,0:T(1,128)}', space=vmem, size = 0x12000, scoped, tag = 'internal scratch']
  %s0 = inlined_call_operand.hbm [shape: f32[2,256,128], index: 0, kind: input, shape index: {}]
  %s1 = inlined_call_operand.hbm [shape: f32[128,128], index: 1, kind: input, shape index: {}]
  %s2 = inlined_call_operand.vmem [shape: f32[1,128], index: 2, kind: input, shape index: {}]
  %s3 = inlined_call_operand.hbm [shape: f32[2,256,128], index: 3, kind: output, shape index: {}]
  %s4 = sld [smem:[#allocation0]]
  $region53: #{tpu_custom_call.1} parent=0
    _
  %s6 = ssub.s32 1, %s4
  %s7 = scalar_select 0, %s6, %s4
  $region1: #{tpu_custom_call.1} parent=0
    #allocation2 [shape = 'u8[262144]{0}', space=vmem, size = 0x40000, scoped, tag = 'input window, operand 0']
    #allocation3 [shape = 's32[2]{0}', space=sflag, size = 0x8, scoped, tag = 'scoped memory for tpu_custom_call.1']
    #allocation4 [shape = 's32[2]{0}', space=sflag, size = 0x8, scoped, tag = 'scoped memory for tpu_custom_call.1']
    #allocation5 [shape = 'u8[65536]{0}', space=vmem, size = 0x10000, scoped, tag = 'input window, operand 1, single buffered']
    #allocation6 [shape = 's32[1]{0}', space=sflag, size = 0x4, scoped, tag = 'scoped memory for tpu_custom_call.1']
    #allocation7 [shape = 'u8[262144]{0}', space=vmem, size = 0x40000, scoped, tag = 'output window, operand 0']
    %8 = vsyncpa [#allocation3], 0
    %s9 = scalar_lea.sflag [#allocation3], 1
    %10 = vsyncpa %s9, 0
    %11 = vsyncpa [#allocation6], 0
    %12 = vsyncpa [#allocation4], 0
    %s13 = scalar_lea.sflag [#allocation4], 1
    %14 = vsyncpa %s13, 0
    loop: start=0, step=1, limit=4
    $region2: #{tpu_custom_call.1} parent=1 // loop_pre_header
      _
    $region3: #{tpu_custom_call.1} parent=1 // loop_header
      %s16 = sphi 0, %s20
      %p17 = scmp.ge.s32.totalorder %s16, 4
      %s23 = sphi 0, %s35
      %s24 = sphi 0, %s31
      %s25 = sphi 0, %s23
      %s26 = sphi 0, %s24
      %s27 = sphi 0, %s25
      %s28 = sphi 0, %s26
      %s40 = sphi 0, %s42
      %s43 = sphi 0, %s40
      %s44 = sphi 0, %s43
      %s60 = sphi 0, %s44
      %s64 = sphi 0, %s64
      %s66 = sphi 0, %s64
      %s67 = sphi 0, %s66
      %s81 = sphi 0, %s67
      %s85 = sphi 0, %s85
      %s87 = sphi 0, %s85
      %s88 = sphi 0, %s87
      %s102 = sphi 0, %s88
      %s110 = sphi 0, %s112
      %s113 = sphi 0, %s110
      %s114 = sphi 0, %s113
      %s130 = sphi 0, %s114
    $region4: #{tpu_custom_call.1} parent=1 // loop_header_branch
      %19 = sbr.rel (%p17) target = $region8
    $region5: #{tpu_custom_call.1} parent=1 // loop_body
      %s21 = ssub.s32 %s16, 1
      %s22 = ssub.s32 %s16, 2
      %s29 = sadd.s32 1, %s24
      %p30 = scmp.ge.s32.totalorder %s29, 1
      %s31 = scalar_select %p30, 0, %s29
      %s32 = sadd.s32 1, %s23
      %s33 = scalar_select %p30, %s32, %s23
      %p34 = scmp.ge.s32.totalorder %s33, 2
      %s35 = scalar_select %p34, 0, %s33
      %s36 = ssub.s32 %s23, %s35
      %s37 = ssub.s32 %s24, %s31
      %s38 = sor.u32 %s36, %s37
      %p39 = scmp.eq.s32.totalorder %s38, 0
      %s41 = sadd.s32 %s40, 1
      %s42 = scalar_select %p39, %s40, %s41
      %p45 = pneg %p39
      %p46 = scmp.eq.s32.totalorder %s16, 1
      %p47 = por %p45, %p46
      %p48 = scmp.ne.s32.totalorder %s40, %s43
      %p49 = scmp.eq.s32.totalorder %s16, 0
      %p50 = por %p48, %p49
      %p51 = scmp.ne.s32.totalorder %s40, %s43
      %p52 = scmp.eq.s32.totalorder %s21, 1
      %p53 = por %p51, %p52
      %p54 = scmp.ne.s32.totalorder %s43, %s44
      %p55 = scmp.eq.s32.totalorder %s21, 0
      %p56 = por %p54, %p55
      %p57 = scmp.ne.s32.totalorder %s43, %s44
      %p58 = scmp.eq.s32.totalorder %s22, 1
      %p59 = por %p57, %p58
      %p61 = scmp.ne.s32.totalorder %s44, %s60
      %p62 = scmp.eq.s32.totalorder %s22, 0
      %p63 = por %p61, %p62
      %s65 = sadd.s32 %s64, 1
      %p68 = scmp.eq.s32.totalorder %s16, 1
      %p69 = scmp.ne.s32.totalorder %s64, %s66
      %p70 = scmp.eq.s32.totalorder %s16, 0
      %p71 = por %p69, %p70
      %p72 = scmp.ne.s32.totalorder %s64, %s66
      %p73 = scmp.eq.s32.totalorder %s21, 1
      %p74 = por %p72, %p73
      %p75 = scmp.ne.s32.totalorder %s66, %s67
      %p76 = scmp.eq.s32.totalorder %s21, 0
      %p77 = por %p75, %p76
      %p78 = scmp.ne.s32.totalorder %s66, %s67
      %p79 = scmp.eq.s32.totalorder %s22, 1
      %p80 = por %p78, %p79
      %p82 = scmp.ne.s32.totalorder %s67, %s81
      %p83 = scmp.eq.s32.totalorder %s22, 0
      %p84 = por %p82, %p83
      %s86 = sadd.s32 %s85, 1
      %p89 = scmp.eq.s32.totalorder %s16, 1
      %p90 = scmp.ne.s32.totalorder %s85, %s87
      %p91 = scmp.eq.s32.totalorder %s16, 0
      %p92 = por %p90, %p91
      %p93 = scmp.ne.s32.totalorder %s85, %s87
      %p94 = scmp.eq.s32.totalorder %s21, 1
      %p95 = por %p93, %p94
      %p96 = scmp.ne.s32.totalorder %s87, %s88
      %p97 = scmp.eq.s32.totalorder %s21, 0
      %p98 = por %p96, %p97
      %p99 = scmp.ne.s32.totalorder %s87, %s88
      %p100 = scmp.eq.s32.totalorder %s22, 1
      %p101 = por %p99, %p100
      %p103 = scmp.ne.s32.totalorder %s88, %s102
      %p104 = scmp.eq.s32.totalorder %s22, 0
      %p105 = por %p103, %p104
      %s106 = ssub.s32 %s23, %s35
      %s107 = ssub.s32 %s24, %s31
      %s108 = sor.u32 %s106, %s107
      %p109 = scmp.eq.s32.totalorder %s108, 0
      %s111 = sadd.s32 %s110, 1
      %s112 = scalar_select %p109, %s110, %s111
      %p115 = pneg %p109
      %p116 = scmp.eq.s32.totalorder %s16, 1
      %p117 = por %p115, %p116
      %p118 = scmp.ne.s32.totalorder %s110, %s113
      %p119 = scmp.eq.s32.totalorder %s16, 0
      %p120 = por %p118, %p119
      %p121 = scmp.ne.s32.totalorder %s110, %s113
      %p122 = scmp.eq.s32.totalorder %s21, 1
      %p123 = por %p121, %p122
      %p124 = scmp.ne.s32.totalorder %s113, %s114
      %p125 = scmp.eq.s32.totalorder %s21, 0
      %p126 = por %p124, %p125
      %p127 = scmp.ne.s32.totalorder %s113, %s114
      %p128 = scmp.eq.s32.totalorder %s22, 1
      %p129 = por %p127, %p128
      %p131 = scmp.ne.s32.totalorder %s114, %s130
      %p132 = scmp.eq.s32.totalorder %s22, 0
      %p133 = por %p131, %p132
      %p134 = scmp.le.s32.totalorder 1, %s16
      %p135 = scmp.lt.s32.totalorder %s16, 3
      %p136 = pnand %p134, %p135
      %p137 = pneg %p136
      // Predicated region
      $region9: #{tpu_custom_call.1} parent=5 // pred_check
        _
      $region10: #{tpu_custom_call.1} parent=5 // pred_check_branch
        %139 = sbr.rel (%p136) target = $region12
      $region11: #{tpu_custom_call.1} parent=5 // pred_region
        %s140 = ssub.s32 %s16, 1
        // Predicated region
        $region13: #{tpu_custom_call.1} parent=11 // pred_check
          %p141 = pneg %p77
        $region14: #{tpu_custom_call.1} parent=11 // pred_check_branch
          %143 = sbr.rel (%p141) target = $region16
        $region15: #{tpu_custom_call.1} parent=11 // pred_region
          %s145 = ssub.s32 2048, 2048
          %146 = vsyncadd [#allocation6], %s145
          %s147 = sshll.u32 [#allocation5], 4
          %s148 = int_to_ptr.vmem [resolvable:$true] %s147
          %153 = dma.hbm_to_vmem [thread:$0]  %s1, 2048, %s148, [#allocation6], 128, 128, 8
        $region16: #{tpu_custom_call.1} parent=11 // pred_fallthru
          _
        // Predicated region
        $region17: #{tpu_custom_call.1} parent=11 // pred_check
          %p154 = pneg %p98
        $region18: #{tpu_custom_call.1} parent=11 // pred_check_branch
          %156 = sbr.rel (%p154) target = $region20
        $region19: #{tpu_custom_call.1} parent=11 // pred_region
          _
        $region20: #{tpu_custom_call.1} parent=11 // pred_fallthru
          _
      $region12: #{tpu_custom_call.1} parent=5 // pred_fallthru
        _
      %p157 = scmp.lt.s32.totalorder %s16, 2
      // Predicated region
      $region21: #{tpu_custom_call.1} parent=5 // pred_check
        %p158 = pneg %p157
      $region22: #{tpu_custom_call.1} parent=5 // pred_check_branch
        %160 = sbr.rel (%p158) target = $region24
      $region23: #{tpu_custom_call.1} parent=5 // pred_region
        // Predicated region
        $region25: #{tpu_custom_call.1} parent=23 // pred_check
          %p161 = pneg %p50
        $region26: #{tpu_custom_call.1} parent=23 // pred_check_branch
          %163 = sbr.rel (%p161) target = $region28
        $region27: #{tpu_custom_call.1} parent=23 // pred_region
          %s164 = sand.u32 %s40, 1
          %s165 = scalar_lea.sflag [#allocation3], %s164
          %s166 = sand.u32 %s40, 1
          %s167 = smul.addr %s166, 256
          %s168 = scalar_lea.vmem [#allocation2], %s167
          %s169 = smul.u32 32, %s24
          %s171 = ssub.s32 4096, 4096
          %172 = vsyncadd %s165, %s171
          %s173 = smul.addr %s23, 32
          %s174 = sadd.s32 %s169, %s173
          %s175 = smul.addr %s174, 128
          %s176 = scalar_lea.hbm %s0, %s175
          %s177 = sshll.u32 %s168, 4
          %s178 = int_to_ptr.vmem [resolvable:$true] %s177
          %183 = dma.hbm_to_vmem [thread:$0]  %s176, 4096, %s178, %s165, 128, 128, 8
        $region28: #{tpu_custom_call.1} parent=23 // pred_fallthru
          _
      $region24: #{tpu_custom_call.1} parent=5 // pred_fallthru
        _
      %p184 = scmp.le.s32.totalorder 1, %s16
      %p185 = scmp.lt.s32.totalorder %s16, 3
      %p186 = pnand %p184, %p185
      %p187 = pneg %p186
      // Predicated region
      $region29: #{tpu_custom_call.1} parent=5 // pred_check
        _
      $region30: #{tpu_custom_call.1} parent=5 // pred_check_branch
        %189 = sbr.rel (%p186) target = $region32
      $region31: #{tpu_custom_call.1} parent=5 // pred_region
        %s190 = ssub.s32 %s16, 1
        %s191 = sand.u32 %s43, 1
        %s192 = scalar_lea.sflag [#allocation3], %s191
        %s193 = sand.u32 %s43, 1
        %s194 = smul.addr %s193, 256
        %s195 = scalar_lea.vmem [#allocation2], %s194
        // Predicated region
        $region33: #{tpu_custom_call.1} parent=31 // pred_check
          %p196 = pneg %p56
        $region34: #{tpu_custom_call.1} parent=31 // pred_check_branch
          %198 = sbr.rel (%p196) target = $region36
        $region35: #{tpu_custom_call.1} parent=31 // pred_region
          %199 = dma.done %s192, 4096
        $region36: #{tpu_custom_call.1} parent=31 // pred_fallthru
          _
        // Predicated region
        $region37: #{tpu_custom_call.1} parent=31 // pred_check
          %p200 = pneg %p77
        $region38: #{tpu_custom_call.1} parent=31 // pred_check_branch
          %202 = sbr.rel (%p200) target = $region40
        $region39: #{tpu_custom_call.1} parent=31 // pred_region
          %203 = dma.done [#allocation6], 2048
        $region40: #{tpu_custom_call.1} parent=31 // pred_fallthru
          _
        %s204 = sand.u32 %s43, 1
        %s205 = scalar_lea.sflag [#allocation3], %s204
        %s206 = sand.u32 %s43, 1
        %s207 = smul.addr %s206, 256
        %s208 = scalar_lea.vmem [#allocation2], %s207
        %p209 = pneg %p56
        %p210 = pneg %p53
        %p211 = pneg %p77
        %p212 = pneg %p74
        %p213 = pneg %p98
        %p214 = pneg %p95
        %p215 = pneg %p126
        %p216 = pneg %p123
        %s217 = sand.u32 %s113, 1
        %s218 = scalar_lea.sflag [#allocation4], %s217
        %s219 = sand.u32 %s113, 1
        %s220 = smul.addr %s219, 256
        %s221 = scalar_lea.vmem [#allocation7], %s220
        %s222 = smul.u32 32, %s26
        %s223 = smul.u32 32, %s26
        %v224 = vld [vmem:[%s195] sm:$0xff]
        %v225 = vld [vmem:[%s195 + $0x8] sm:$0xff]
        %v226 = vld [vmem:[%s195 + $0x10] sm:$0xff]
        %v227 = vld [vmem:[%s195 + $0x18] sm:$0xff]
        %v228 = vld [vmem:[%s195 + $0x20] sm:$0xff]
        %v229 = vld [vmem:[%s195 + $0x28] sm:$0xff]
        %v230 = vld [vmem:[%s195 + $0x30] sm:$0xff]
        %v231 = vld [vmem:[%s195 + $0x38] sm:$0xff]
        %v232 = vld [vmem:[%s195 + $0x40] sm:$0xff]
        %v233 = vld [vmem:[%s195 + $0x48] sm:$0xff]
        %v234 = vld [vmem:[%s195 + $0x50] sm:$0xff]
        %v235 = vld [vmem:[%s195 + $0x58] sm:$0xff]
        %v236 = vld [vmem:[%s195 + $0x60] sm:$0xff]
        %v237 = vld [vmem:[%s195 + $0x68] sm:$0xff]
        %v238 = vld [vmem:[%s195 + $0x70] sm:$0xff]
        %v239 = vld [vmem:[%s195 + $0x78] sm:$0xff]
        %v240 = vld [vmem:[%s195 + $0x80] sm:$0xff]
        %v241 = vld [vmem:[%s195 + $0x88] sm:$0xff]
        %v242 = vld [vmem:[%s195 + $0x90] sm:$0xff]
        %v243 = vld [vmem:[%s195 + $0x98] sm:$0xff]
        %v244 = vld [vmem:[%s195 + $0xa0] sm:$0xff]
        %v245 = vld [vmem:[%s195 + $0xa8] sm:$0xff]
        %v246 = vld [vmem:[%s195 + $0xb0] sm:$0xff]
        %v247 = vld [vmem:[%s195 + $0xb8] sm:$0xff]
        %v248 = vld [vmem:[%s195 + $0xc0] sm:$0xff]
        %v249 = vld [vmem:[%s195 + $0xc8] sm:$0xff]
        %v250 = vld [vmem:[%s195 + $0xd0] sm:$0xff]
        %v251 = vld [vmem:[%s195 + $0xd8] sm:$0xff]
        %v252 = vld [vmem:[%s195 + $0xe0] sm:$0xff]
        %v253 = vld [vmem:[%s195 + $0xe8] sm:$0xff]
        %v254 = vld [vmem:[%s195 + $0xf0] sm:$0xff]
        %v255 = vld [vmem:[%s195 + $0xf8] sm:$0xff]
        %v256 = vld [vmem:[#allocation5] sm:$0xff]
        %v257 = vld [vmem:[#allocation5 + $0x8] sm:$0xff]
        %v258 = vld [vmem:[#allocation5 + $0x10] sm:$0xff]
        %v259 = vld [vmem:[#allocation5 + $0x18] sm:$0xff]
        %v260 = vld [vmem:[#allocation5 + $0x20] sm:$0xff]
        %v261 = vld [vmem:[#allocation5 + $0x28] sm:$0xff]
        %v262 = vld [vmem:[#allocation5 + $0x30] sm:$0xff]
        %v263 = vld [vmem:[#allocation5 + $0x38] sm:$0xff]
        %v264 = vld [vmem:[#allocation5 + $0x40] sm:$0xff]
        %v265 = vld [vmem:[#allocation5 + $0x48] sm:$0xff]
        %v266 = vld [vmem:[#allocation5 + $0x50] sm:$0xff]
        %v267 = vld [vmem:[#allocation5 + $0x58] sm:$0xff]
        %v268 = vld [vmem:[#allocation5 + $0x60] sm:$0xff]
        %v269 = vld [vmem:[#allocation5 + $0x68] sm:$0xff]
        %v270 = vld [vmem:[#allocation5 + $0x70] sm:$0xff]
        %v271 = vld [vmem:[#allocation5 + $0x78] sm:$0xff]
        %v272 = vld [vmem:[%s2] sm:$0x1]
        %v274 = vlaneseq
        %v275 = vshrl.u32 %v274, 7
        %v276 = vsub.s32 0, %v275
        %v277 = vrot.slane %v272, %v276
        %279 = vmatprep.subr.mxu0 0.0
        %280 = vmatpush1.msra.mxu0 %v271
        %281 = vmatprep.subr.mxu0 0.0
        %282 = vmatpush1.msra.mxu0 %v270
        %283 = vmatprep.subr.mxu0 0.0
        %284 = vmatpush1.msra.mxu0 %v269
        %285 = vmatprep.subr.mxu0 0.0
        %286 = vmatpush1.msra.mxu0 %v268
        %287 = vmatprep.subr.mxu0 0.0
        %288 = vmatpush1.msra.mxu0 %v267
        %289 = vmatprep.subr.mxu0 0.0
        %290 = vmatpush1.msra.mxu0 %v266
        %291 = vmatprep.subr.mxu0 0.0
        %292 = vmatpush1.msra.mxu0 %v265
        %293 = vmatprep.subr.mxu0 0.0
        %294 = vmatpush1.msra.mxu0 %v264
        %295 = vmatprep.subr.mxu0 0.0
        %296 = vmatpush1.msra.mxu0 %v263
        %297 = vmatprep.subr.mxu0 0.0
        %298 = vmatpush1.msra.mxu0 %v262
        %299 = vmatprep.subr.mxu0 0.0
        %300 = vmatpush1.msra.mxu0 %v261
        %301 = vmatprep.subr.mxu0 0.0
        %302 = vmatpush1.msra.mxu0 %v260
        %303 = vmatprep.subr.mxu0 0.0
        %304 = vmatpush1.msra.mxu0 %v259
        %305 = vmatprep.subr.mxu0 0.0
        %306 = vmatpush1.msra.mxu0 %v258
        %307 = vmatprep.subr.mxu0 0.0
        %308 = vmatpush1.msra.mxu0 %v257
        %309 = vmatprep.subr.mxu0 0.0
        %310 = vmatpush1.msra.mxu0 %v256
        %311 = vmatprep.subr.mxu0 0.0
        %312 = vmatpush2.msra.mxu0 0.0
        %313 = vmatprep.subr.mxu0 0.0
        %314 = vmatpush2.msra.mxu0 0.0
        %315 = vmatprep.subr.mxu0 0.0
        %316 = vmatpush2.msra.mxu0 0.0
        %317 = vmatprep.subr.mxu0 0.0
        %318 = vmatpush2.msra.mxu0 0.0
        %319 = vmatprep.subr.mxu0 0.0
        %320 = vmatpush2.msra.mxu0 0.0
        %321 = vmatprep.subr.mxu0 0.0
        %322 = vmatpush2.msra.mxu0 0.0
        %323 = vmatprep.subr.mxu0 0.0
        %324 = vmatpush2.msra.mxu0 0.0
        %325 = vmatprep.subr.mxu0 0.0
        %326 = vmatpush2.msra.mxu0 0.0
        %327 = vmatprep.subr.mxu0 0.0
        %328 = vmatpush2.msra.mxu0 0.0
        %329 = vmatprep.subr.mxu0 0.0
        %330 = vmatpush2.msra.mxu0 0.0
        %331 = vmatprep.subr.mxu0 0.0
        %332 = vmatpush2.msra.mxu0 0.0
        %333 = vmatprep.subr.mxu0 0.0
        %334 = vmatpush2.msra.mxu0 0.0
        %335 = vmatprep.subr.mxu0 0.0
        %336 = vmatpush2.msra.mxu0 0.0
        %337 = vmatprep.subr.mxu0 0.0
        %338 = vmatpush2.msra.mxu0 0.0
        %339 = vmatprep.subr.mxu0 0.0
        %340 = vmatpush2.msra.mxu0 0.0
        %341 = vmatprep.subr.mxu0 0.0
        %342 = vmatpush2.msra.mxu0 0.0
        %343 = vmatprep.mubr.f32.mxu0 0.0
        %344 = vmatmul.mubr.f32.gmra.mxu0 %v224
        %v345 = vpop.f32.mrf.mxu0
        %v346 = vadd.f32 %v277, %v345
        %v347 = vpop.f32.mrf.mxu0
        %348 = vmatprep.mubr.f32.mxu0 0.0
        %349 = vmatmul.mubr.f32.gmra.mxu0 %v225
        %v350 = vpop.f32.mrf.mxu0
        %v351 = vadd.f32 %v277, %v350
        %v352 = vpop.f32.mrf.mxu0
        %353 = vmatprep.mubr.f32.mxu0 0.0
        %354 = vmatmul.mubr.f32.gmra.mxu0 %v226
        %v355 = vpop.f32.mrf.mxu0
        %v356 = vadd.f32 %v277, %v355
        %v357 = vpop.f32.mrf.mxu0
        %358 = vmatprep.mubr.f32.mxu0 0.0
        %359 = vmatmul.mubr.f32.gmra.mxu0 %v227
        %v360 = vpop.f32.mrf.mxu0
        %v361 = vadd.f32 %v277, %v360
        %v362 = vpop.f32.mrf.mxu0
        %363 = vmatprep.mubr.f32.mxu0 0.0
        %364 = vmatmul.mubr.f32.gmra.mxu0 %v228
        %v365 = vpop.f32.mrf.mxu0
        %v366 = vadd.f32 %v277, %v365
        %v367 = vpop.f32.mrf.mxu0
        %368 = vmatprep.mubr.f32.mxu0 0.0
        %369 = vmatmul.mubr.f32.gmra.mxu0 %v229
        %v370 = vpop.f32.mrf.mxu0
        %v371 = vadd.f32 %v277, %v370
        %v372 = vpop.f32.mrf.mxu0
        %373 = vmatprep.mubr.f32.mxu0 0.0
        %374 = vmatmul.mubr.f32.gmra.mxu0 %v230
        %v375 = vpop.f32.mrf.mxu0
        %v376 = vadd.f32 %v277, %v375
        %v377 = vpop.f32.mrf.mxu0
        %378 = vmatprep.mubr.f32.mxu0 0.0
        %379 = vmatmul.mubr.f32.gmra.mxu0 %v231
        %v380 = vpop.f32.mrf.mxu0
        %v381 = vadd.f32 %v277, %v380
        %v382 = vpop.f32.mrf.mxu0
        %383 = vmatprep.mubr.f32.mxu0 0.0
        %384 = vmatmul.mubr.f32.gmra.mxu0 %v232
        %v385 = vpop.f32.mrf.mxu0
        %v386 = vadd.f32 %v277, %v385
        %v387 = vpop.f32.mrf.mxu0
        %388 = vmatprep.mubr.f32.mxu0 0.0
        %389 = vmatmul.mubr.f32.gmra.mxu0 %v233
        %v390 = vpop.f32.mrf.mxu0
        %v391 = vadd.f32 %v277, %v390
        %v392 = vpop.f32.mrf.mxu0
        %393 = vmatprep.mubr.f32.mxu0 0.0
        %394 = vmatmul.mubr.f32.gmra.mxu0 %v234
        %v395 = vpop.f32.mrf.mxu0
        %v396 = vadd.f32 %v277, %v395
        %v397 = vpop.f32.mrf.mxu0
        %398 = vmatprep.mubr.f32.mxu0 0.0
        %399 = vmatmul.mubr.f32.gmra.mxu0 %v235
        %v400 = vpop.f32.mrf.mxu0
        %v401 = vadd.f32 %v277, %v400
        %v402 = vpop.f32.mrf.mxu0
        %403 = vmatprep.mubr.f32.mxu0 0.0
        %404 = vmatmul.mubr.f32.gmra.mxu0 %v236
        %v405 = vpop.f32.mrf.mxu0
        %v406 = vadd.f32 %v277, %v405
        %v407 = vpop.f32.mrf.mxu0
        %408 = vmatprep.mubr.f32.mxu0 0.0
        %409 = vmatmul.mubr.f32.gmra.mxu0 %v237
        %v410 = vpop.f32.mrf.mxu0
        %v411 = vadd.f32 %v277, %v410
        %v412 = vpop.f32.mrf.mxu0
        %413 = vmatprep.mubr.f32.mxu0 0.0
        %414 = vmatmul.mubr.f32.gmra.mxu0 %v238
        %v415 = vpop.f32.mrf.mxu0
        %v416 = vadd.f32 %v277, %v415
        %v417 = vpop.f32.mrf.mxu0
        %418 = vmatprep.mubr.f32.mxu0 0.0
        %419 = vmatmul.mubr.f32.gmra.mxu0 %v239
        %v420 = vpop.f32.mrf.mxu0
        %v421 = vadd.f32 %v277, %v420
        %v422 = vpop.f32.mrf.mxu0
        %423 = vmatprep.mubr.f32.mxu0 0.0
        %424 = vmatmul.mubr.f32.gmra.mxu0 %v240
        %v425 = vpop.f32.mrf.mxu0
        %v426 = vadd.f32 %v277, %v425
        %v427 = vpop.f32.mrf.mxu0
        %428 = vmatprep.mubr.f32.mxu0 0.0
        %429 = vmatmul.mubr.f32.gmra.mxu0 %v241
        %v430 = vpop.f32.mrf.mxu0
        %v431 = vadd.f32 %v277, %v430
        %v432 = vpop.f32.mrf.mxu0
        %433 = vmatprep.mubr.f32.mxu0 0.0
        %434 = vmatmul.mubr.f32.gmra.mxu0 %v242
        %v435 = vpop.f32.mrf.mxu0
        %v436 = vadd.f32 %v277, %v435
        %v437 = vpop.f32.mrf.mxu0
        %438 = vmatprep.mubr.f32.mxu0 0.0
        %439 = vmatmul.mubr.f32.gmra.mxu0 %v243
        %v440 = vpop.f32.mrf.mxu0
        %v441 = vadd.f32 %v277, %v440
        %v442 = vpop.f32.mrf.mxu0
        %443 = vmatprep.mubr.f32.mxu0 0.0
        %444 = vmatmul.mubr.f32.gmra.mxu0 %v244
        %v445 = vpop.f32.mrf.mxu0
        %v446 = vadd.f32 %v277, %v445
        %v447 = vpop.f32.mrf.mxu0
        %448 = vmatprep.mubr.f32.mxu0 0.0
        %449 = vmatmul.mubr.f32.gmra.mxu0 %v245
        %v450 = vpop.f32.mrf.mxu0
        %v451 = vadd.f32 %v277, %v450
        %v452 = vpop.f32.mrf.mxu0
        %453 = vmatprep.mubr.f32.mxu0 0.0
        %454 = vmatmul.mubr.f32.gmra.mxu0 %v246
        %v455 = vpop.f32.mrf.mxu0
        %v456 = vadd.f32 %v277, %v455
        %v457 = vpop.f32.mrf.mxu0
        %458 = vmatprep.mubr.f32.mxu0 0.0
        %459 = vmatmul.mubr.f32.gmra.mxu0 %v247
        %v460 = vpop.f32.mrf.mxu0
        %v461 = vadd.f32 %v277, %v460
        %v462 = vpop.f32.mrf.mxu0
        %463 = vmatprep.mubr.f32.mxu0 0.0
        %464 = vmatmul.mubr.f32.gmra.mxu0 %v248
        %v465 = vpop.f32.mrf.mxu0
        %v466 = vadd.f32 %v277, %v465
        %v467 = vpop.f32.mrf.mxu0
        %468 = vmatprep.mubr.f32.mxu0 0.0
        %469 = vmatmul.mubr.f32.gmra.mxu0 %v249
        %v470 = vpop.f32.mrf.mxu0
        %v471 = vadd.f32 %v277, %v470
        %v472 = vpop.f32.mrf.mxu0
        %473 = vmatprep.mubr.f32.mxu0 0.0
        %474 = vmatmul.mubr.f32.gmra.mxu0 %v250
        %v475 = vpop.f32.mrf.mxu0
        %v476 = vadd.f32 %v277, %v475
        %v477 = vpop.f32.mrf.mxu0
        %478 = vmatprep.mubr.f32.mxu0 0.0
        %479 = vmatmul.mubr.f32.gmra.mxu0 %v251
        %v480 = vpop.f32.mrf.mxu0
        %v481 = vadd.f32 %v277, %v480
        %v482 = vpop.f32.mrf.mxu0
        %483 = vmatprep.mubr.f32.mxu0 0.0
        %484 = vmatmul.mubr.f32.gmra.mxu0 %v252
        %v485 = vpop.f32.mrf.mxu0
        %v486 = vadd.f32 %v277, %v485
        %v487 = vpop.f32.mrf.mxu0
        %488 = vmatprep.mubr.f32.mxu0 0.0
        %489 = vmatmul.mubr.f32.gmra.mxu0 %v253
        %v490 = vpop.f32.mrf.mxu0
        %v491 = vadd.f32 %v277, %v490
        %v492 = vpop.f32.mrf.mxu0
        %493 = vmatprep.mubr.f32.mxu0 0.0
        %494 = vmatmul.mubr.f32.gmra.mxu0 %v254
        %v495 = vpop.f32.mrf.mxu0
        %v496 = vadd.f32 %v277, %v495
        %v497 = vpop.f32.mrf.mxu0
        %498 = vmatprep.mubr.f32.mxu0 0.0
        %499 = vmatmul.mubr.f32.gmra.mxu0 %v255
        %v500 = vpop.f32.mrf.mxu0
        %v501 = vadd.f32 %v277, %v500
        %v502 = vpop.f32.mrf.mxu0
        %503 = vdwg.mxu0
        %v504 = vmax.f32 %v346, 0.0
        %v505 = vmax.f32 %v351, 0.0
        %v506 = vmax.f32 %v356, 0.0
        %v507 = vmax.f32 %v361, 0.0
        %v508 = vmax.f32 %v366, 0.0
        %v509 = vmax.f32 %v371, 0.0
        %v510 = vmax.f32 %v376, 0.0
        %v511 = vmax.f32 %v381, 0.0
        %v512 = vmax.f32 %v386, 0.0
        %v513 = vmax.f32 %v391, 0.0
        %v514 = vmax.f32 %v396, 0.0
        %v515 = vmax.f32 %v401, 0.0
        %v516 = vmax.f32 %v406, 0.0
        %v517 = vmax.f32 %v411, 0.0
        %v518 = vmax.f32 %v416, 0.0
        %v519 = vmax.f32 %v421, 0.0
        %v520 = vmax.f32 %v426, 0.0
        %v521 = vmax.f32 %v431, 0.0
        %v522 = vmax.f32 %v436, 0.0
        %v523 = vmax.f32 %v441, 0.0
        %v524 = vmax.f32 %v446, 0.0
        %v525 = vmax.f32 %v451, 0.0
        %v526 = vmax.f32 %v456, 0.0
        %v527 = vmax.f32 %v461, 0.0
        %v528 = vmax.f32 %v466, 0.0
        %v529 = vmax.f32 %v471, 0.0
        %v530 = vmax.f32 %v476, 0.0
        %v531 = vmax.f32 %v481, 0.0
        %v532 = vmax.f32 %v486, 0.0
        %v533 = vmax.f32 %v491, 0.0
        %v534 = vmax.f32 %v496, 0.0
        %v535 = vmax.f32 %v501, 0.0
        %536 = vst [vmem:[%s221] sm:$0xff] %v504
        %537 = vst [vmem:[%s221 + $0x8] sm:$0xff] %v505
        %538 = vst [vmem:[%s221 + $0x10] sm:$0xff] %v506
        %539 = vst [vmem:[%s221 + $0x18] sm:$0xff] %v507
        %540 = vst [vmem:[%s221 + $0x20] sm:$0xff] %v508
        %541 = vst [vmem:[%s221 + $0x28] sm:$0xff] %v509
        %542 = vst [vmem:[%s221 + $0x30] sm:$0xff] %v510
        %543 = vst [vmem:[%s221 + $0x38] sm:$0xff] %v511
        %544 = vst [vmem:[%s221 + $0x40] sm:$0xff] %v512
        %545 = vst [vmem:[%s221 + $0x48] sm:$0xff] %v513
        %546 = vst [vmem:[%s221 + $0x50] sm:$0xff] %v514
        %547 = vst [vmem:[%s221 + $0x58] sm:$0xff] %v515
        %548 = vst [vmem:[%s221 + $0x60] sm:$0xff] %v516
        %549 = vst [vmem:[%s221 + $0x68] sm:$0xff] %v517
        %550 = vst [vmem:[%s221 + $0x70] sm:$0xff] %v518
        %551 = vst [vmem:[%s221 + $0x78] sm:$0xff] %v519
        %552 = vst [vmem:[%s221 + $0x80] sm:$0xff] %v520
        %553 = vst [vmem:[%s221 + $0x88] sm:$0xff] %v521
        %554 = vst [vmem:[%s221 + $0x90] sm:$0xff] %v522
        %555 = vst [vmem:[%s221 + $0x98] sm:$0xff] %v523
        %556 = vst [vmem:[%s221 + $0xa0] sm:$0xff] %v524
        %557 = vst [vmem:[%s221 + $0xa8] sm:$0xff] %v525
        %558 = vst [vmem:[%s221 + $0xb0] sm:$0xff] %v526
        %559 = vst [vmem:[%s221 + $0xb8] sm:$0xff] %v527
        %560 = vst [vmem:[%s221 + $0xc0] sm:$0xff] %v528
        %561 = vst [vmem:[%s221 + $0xc8] sm:$0xff] %v529
        %562 = vst [vmem:[%s221 + $0xd0] sm:$0xff] %v530
        %563 = vst [vmem:[%s221 + $0xd8] sm:$0xff] %v531
        %564 = vst [vmem:[%s221 + $0xe0] sm:$0xff] %v532
        %565 = vst [vmem:[%s221 + $0xe8] sm:$0xff] %v533
        %566 = vst [vmem:[%s221 + $0xf0] sm:$0xff] %v534
        %567 = vst [vmem:[%s221 + $0xf8] sm:$0xff] %v535
        %s568 = sand.u32 %s113, 1
        %s569 = scalar_lea.sflag [#allocation4], %s568
        %s570 = sand.u32 %s113, 1
        %s571 = smul.addr %s570, 256
        %s572 = scalar_lea.vmem [#allocation7], %s571
        // Predicated region
        $region41: #{tpu_custom_call.1} parent=31 // pred_check
          %p573 = pneg %p123
        $region42: #{tpu_custom_call.1} parent=31 // pred_check_branch
          %575 = sbr.rel (%p573) target = $region44
        $region43: #{tpu_custom_call.1} parent=31 // pred_region
          %s576 = smul.u32 32, %s26
          %s578 = ssub.s32 4096, 4096
          %579 = vsyncadd %s569, %s578
          %s580 = smul.addr %s25, 32
          %s581 = sadd.s32 %s576, %s580
          %s582 = smul.addr %s581, 128
          %s583 = scalar_lea.hbm %s3, %s582
          %s584 = sshll.u32 %s572, 4
          %s585 = int_to_ptr.vmem [resolvable:$true] %s584
          %590 = dma.vmem_to_hbm [thread:$0]  %s585, 4096, %s583, %s569, 128, 128, 8
        $region44: #{tpu_custom_call.1} parent=31 // pred_fallthru
          _
      $region32: #{tpu_custom_call.1} parent=5 // pred_fallthru
        _
      %p591 = scmp.le.s32.totalorder 2, %s16
      // Predicated region
      $region45: #{tpu_custom_call.1} parent=5 // pred_check
        %p592 = pneg %p591
      $region46: #{tpu_custom_call.1} parent=5 // pred_check_branch
        %594 = sbr.rel (%p592) target = $region48
      $region47: #{tpu_custom_call.1} parent=5 // pred_region
        %s595 = ssub.s32 %s16, 2
        // Predicated region
        $region49: #{tpu_custom_call.1} parent=47 // pred_check
          %p596 = pneg %p129
        $region50: #{tpu_custom_call.1} parent=47 // pred_check_branch
          %598 = sbr.rel (%p596) target = $region52
        $region51: #{tpu_custom_call.1} parent=47 // pred_region
          %s599 = sand.u32 %s114, 1
          %s600 = scalar_lea.sflag [#allocation4], %s599
          %s601 = sand.u32 %s114, 1
          %s602 = smul.addr %s601, 256
          %s603 = scalar_lea.vmem [#allocation7], %s602
          %604 = dma.done %s600, 4096
        $region52: #{tpu_custom_call.1} parent=47 // pred_fallthru
          _
      $region48: #{tpu_custom_call.1} parent=5 // pred_fallthru
        _
    $region6: #{tpu_custom_call.1} parent=1 // loop_footer
      %s20 = sadd.s32 1, %s16
    $region7: #{tpu_custom_call.1} parent=1 // loop_footer_branch
      %15 = sbr.rel target = $region3
    $region8: #{tpu_custom_call.1} parent=1 // loop_exit
      _
    %605 = vsyncpa [#allocation3], 1
    %s606 = scalar_lea.sflag [#allocation3], 1
    %607 = vsyncpa %s606, 1
    %608 = vsyncpa [#allocation6], 1
    %609 = vsyncpa [#allocation4], 1
    %s610 = scalar_lea.sflag [#allocation4], 1
    %611 = vsyncpa %s610, 1

</llo_original>
